<compile_context>
chip_gen: v7x
topology: tpu7x:2x2x1
jax: 0.10.0
libtpu: 0.0.40
codegen_flags: <defaults>
</compile_context>

<pallas_src>
import jax
import jax.numpy as jnp
from jax.experimental import pallas as pl
from jax.experimental.pallas import tpu as pltpu

_HW = 128  # lane width of the hidden stage (first-matmul N == second-matmul K)


def _make_kernel(k1):
    """k1 = padded (state_size + 1) row count of the first-stage weight block."""

    def kernel(state_ref, slab_ref, out_ref):
        # Static, tile-aligned views into the single packed weight slab
        # (row splits at multiples of 8, column splits at multiples of 128).
        w_in = slab_ref[0:k1, 0:_HW]           # (k1, 128)  first-stage weights
        w_big = slab_ref[k1:k1 + _HW, :]       # (128, NW)  fused heads + fused bias
        # Trunk: relu(state_aug @ W_in_aug); b_in rides on the ones column and
        # the constant-1 hidden unit (relu(1)=1) carries the fused bias below.
        h = jnp.maximum(
            jnp.dot(state_ref[...], w_in, preferred_element_type=jnp.float32),
            0.0)
        h = h.astype(w_big.dtype)              # no-op in f32, rounds in bf16 path
        # All heads at once; single lane-dense (unmasked) output store.
        out_ref[...] = jnp.dot(h, w_big, preferred_element_type=jnp.float32)

    return kernel


def pack_params(params, weight_dtype=jnp.float32):
    """Precompute the packed weight slab. Call ONCE per parameter update."""
    w_in_t, b_in, w_hid_t, b_hid, w_out_t, b_out = params
    S, H = w_in_t.shape
    heads, _, A = w_out_t.shape
    N = heads * A
    assert H + 1 <= _HW, "hidden size + constant unit must fit in 128 lanes"

    f32 = jnp.float32
    b_in = jnp.asarray(b_in, f32).reshape(1, H)          # defensive reshape
    b_hid = jnp.asarray(b_hid, f32).reshape(heads, H)
    b_out = jnp.asarray(b_out, f32).reshape(heads, A)

    K1 = max(8, pl.cdiv(S + 1, 8) * 8)                   # padded K of matmul 1
    NW = max(128, pl.cdiv(N, 128) * 128)                 # lane-dense output width

    # Fuse hidden_i -> output_i (no activation between them): exact algebra.
    w_fused = jnp.einsum('hij,hjk->hik', w_hid_t.astype(f32), w_out_t.astype(f32))
    b_fused = jnp.einsum('hj,hjk->hk', b_hid, w_out_t.astype(f32)) + b_out
    w_fused_all = jnp.transpose(w_fused, (1, 0, 2)).reshape(H, N)   # (H, heads*A)
    b_fused_all = b_fused.reshape(N)                                # (heads*A,)

    # First-stage block: W_in^T, bias row, and a constant-1 hidden unit driver.
    w_in_blk = jnp.zeros((K1, _HW), f32)
    w_in_blk = w_in_blk.at[:S, :H].set(w_in_t.astype(f32))
    w_in_blk = w_in_blk.at[S, :H].set(b_in[0])     # bias row (ones column of state)
    w_in_blk = w_in_blk.at[S, H].set(1.0)          # constant unit: relu(1) == 1

    # Second-stage block: fused heads; fused bias sits on the constant-1 row.
    w_big_blk = jnp.zeros((_HW, NW), f32)
    w_big_blk = w_big_blk.at[:H, :N].set(w_fused_all)
    w_big_blk = w_big_blk.at[H, :N].set(b_fused_all)

    if NW > _HW:
        w_in_blk = jnp.pad(w_in_blk, ((0, 0), (0, NW - _HW)))
    slab = jnp.concatenate([w_in_blk, w_big_blk], axis=0)           # (K1+128, NW)
    return slab.astype(weight_dtype)


def dqn_forward_packed(state, w_slab, heads, action_size):
    """Multi-head DQN forward with precomputed packed weights. Returns list of (B, A)."""
    B, S = state.shape
    K1 = w_slab.shape[0] - _HW
    NW = w_slab.shape[1]
    A = action_size
    N = heads * A
    dtype = w_slab.dtype

    # Augment state with the ones column (drives bias + constant-1 unit), pad K to K1.
    state_aug = jnp.zeros((B, K1), jnp.float32)
    state_aug = state_aug.at[:, :S].set(state.astype(jnp.float32))
    state_aug = state_aug.at[:, S].set(1.0)

    # Batch tiling: whole batch in one step when small, 512-row tiles when large.
    TB = min(512, max(8, pl.cdiv(B, 8) * 8))
    B_pad = pl.cdiv(B, TB) * TB
    if B_pad != B:
        state_aug = jnp.pad(state_aug, ((0, B_pad - B), (0, 0)))
    state_aug = state_aug.astype(dtype)

    out = pl.pallas_call(
        _make_kernel(K1),
        out_shape=jax.ShapeDtypeStruct((B_pad, NW), jnp.float32),
        grid=(B_pad // TB,),
        in_specs=[
            pl.BlockSpec((TB, K1), lambda i: (i, 0)),           # state tile
            pl.BlockSpec((K1 + _HW, NW), lambda i: (0, 0)),     # weights: VMEM-resident
        ],
        out_specs=pl.BlockSpec((TB, NW), lambda i: (i, 0)),
        compiler_params=pltpu.CompilerParams(
            dimension_semantics=("parallel",)),                 # megacore on v7x
    )(state_aug, w_slab)

    y_all = out[:B, :N]                                         # (B, heads*A)
    return [y_all[:, h * A:(h + 1) * A] for h in range(heads)]


def dqn_forward(state, params, weight_dtype=jnp.float32):
    """Convenience wrapper: packs params then runs the kernel (prefer pack once)."""
    heads, _, A = params[4].shape
    return dqn_forward_packed(state, pack_params(params, weight_dtype), heads, A)


def init_params(key, state_size, action_size, heads, hidden=24):
    """Deterministic synthetic parameters (shapes mirror the nn.Module, pre-transposed)."""
    ks = jax.random.split(key, 6)
    scale = 0.1
    w_in_t = scale * jax.random.normal(ks[0], (state_size, hidden), jnp.float32)
    b_in = scale * jax.random.normal(ks[1], (1, hidden), jnp.float32)
    w_hid_t = scale * jax.random.normal(ks[2], (heads, hidden, hidden), jnp.float32)
    b_hid = scale * jax.random.normal(ks[3], (heads, hidden), jnp.float32)
    w_out_t = scale * jax.random.normal(ks[4], (heads, hidden, action_size), jnp.float32)
    b_out = scale * jax.random.normal(ks[5], (heads, action_size), jnp.float32)
    return (w_in_t, b_in, w_hid_t, b_hid, w_out_t, b_out)


def dqn_reference(state, params):
    """Pure-JAX reference matching the PyTorch forward layer-by-layer."""
    w_in_t, b_in, w_hid_t, b_hid, w_out_t, b_out = params
    w = jnp.maximum(state @ w_in_t + b_in, 0.0)
    ys = []
    for i in range(w_hid_t.shape[0]):
        x = w @ w_hid_t[i] + b_hid[i][None, :]
        ys.append(x @ w_out_t[i] + b_out[i][None, :])
    return ys


if __name__ == "__main__":
    key = jax.random.PRNGKey(0)
    state_size, action_size, heads = 4, 2, 3     # CartPole-like
    batch = 8

    k_state, k_params = jax.random.split(key)
    state = jax.random.normal(k_state, (batch, state_size), jnp.float32)
    params = init_params(k_params, state_size, action_size, heads)

    ys_ref = dqn_reference(state, params)

    # --- f32 path: pack once (hoisted out of the per-step path), reuse ---------
    slab_f32 = jax.block_until_ready(pack_params(params, jnp.float32))
    ys = dqn_forward_packed(state, slab_f32, heads, action_size)
    ys = [jax.block_until_ready(y) for y in ys]
    for y, y_ref in zip(ys, ys_ref):
        assert y.shape == (batch, action_size)
        assert jnp.allclose(y, y_ref, atol=1e-5, rtol=1e-5), "f32 mismatch vs reference"

    # --- bf16 weight path (native MXU datapath, f32 accumulation) --------------
    slab_bf16 = jax.block_until_ready(pack_params(params, jnp.bfloat16))
    ys_bf16 = dqn_forward_packed(state, slab_bf16, heads, action_size)
    ys_bf16 = [jax.block_until_ready(y) for y in ys_bf16]
    for y, y_ref in zip(ys_bf16, ys_ref):
        assert y.shape == (batch, action_size)
        assert jnp.allclose(y, y_ref, atol=3e-2, rtol=3e-2), "bf16 mismatch vs reference"

    print("KERNEL_OK")
</pallas_src>

<mosaic_0001>
module attributes {stable_mosaic.version = 11 : i64} {
  func.func @kernel(%arg0: i32, %arg1: memref<8x8xf32, #tpu.memory_space<vmem>>, %arg2: memref<136x128xf32, #tpu.memory_space<vmem>>, %arg3: memref<8x128xf32, #tpu.memory_space<vmem>>) attributes {dimension_semantics = [#tpu.dimension_semantics<parallel>], iteration_bounds = array<i64: 1>, scalar_prefetch = 0 : i64, scratch_operands = 0 : i64, tpu.core_type = #tpu.core_type<tc>, window_params = [{transform_indices = @transform_0, window_bounds = array<i64: 8, 8>}, {pipeline_mode = #tpu.pipeline_mode<synchronous>, transform_indices = @transform_1, window_bounds = array<i64: 136, 128>}, {transform_indices = @transform_2, window_bounds = array<i64: 8, 128>}]} {
    %c0 = arith.constant 0 : index
    %c0_0 = arith.constant 0 : index
    %0 = vector.load %arg2[%c0, %c0_0] : memref<136x128xf32, #tpu.memory_space<vmem>>, vector<8x128xf32>
    %c8 = arith.constant 8 : index
    %c0_1 = arith.constant 0 : index
    %1 = vector.load %arg2[%c8, %c0_1] : memref<136x128xf32, #tpu.memory_space<vmem>>, vector<128x128xf32>
    %c0_2 = arith.constant 0 : index
    %c0_3 = arith.constant 0 : index
    %2 = vector.load %arg1[%c0_2, %c0_3] : memref<8x8xf32, #tpu.memory_space<vmem>>, vector<8x8xf32>
    %cst = arith.constant dense<0.000000e+00> : vector<8x128xf32>
    %3 = tpu.matmul %2, %0, %cst {dimension_numbers = #tpu.dot_dimension_numbers<[1], [0], [0], [1], [0, 0, 1, 1], [], []>} : vector<8x8xf32>, vector<8x128xf32>, vector<8x128xf32> -> vector<8x128xf32>
    %cst_4 = arith.constant 0.000000e+00 : f32
    %4 = vector.broadcast %cst_4 : f32 to vector<8x128xf32>
    %5 = arith.maximumf %3, %4 : vector<8x128xf32>
    %cst_5 = arith.constant dense<0.000000e+00> : vector<8x128xf32>
    %6 = tpu.matmul %5, %1, %cst_5 {dimension_numbers = #tpu.dot_dimension_numbers<[1], [0], [0], [1], [0, 0, 1, 1], [], []>} : vector<8x128xf32>, vector<128x128xf32>, vector<8x128xf32> -> vector<8x128xf32>
    %c0_6 = arith.constant 0 : index
    %c0_7 = arith.constant 0 : index
    %7 = vector.load %arg3[%c0_6, %c0_7] : memref<8x128xf32, #tpu.memory_space<vmem>>, vector<8x128xf32>
    tpu.vector_store %arg3[%c0_6, %c0_7], %6 {strides = array<i32>} : memref<8x128xf32, #tpu.memory_space<vmem>>, vector<8x128xf32>,
    return
  }
  func.func @transform_0(%arg0: i32) -> (i32, i32) {
    %c0_i32 = arith.constant 0 : i32
    %c0_i32_0 = arith.constant 0 : i32
    return %arg0, %c0_i32 : i32, i32
  }
  func.func @transform_1(%arg0: i32) -> (i32, i32) {
    %c0_i32 = arith.constant 0 : i32
    %c0_i32_0 = arith.constant 0 : i32
    %c0_i32_1 = arith.constant 0 : i32
    return %c0_i32, %c0_i32_0 : i32, i32
  }
  func.func @transform_2(%arg0: i32) -> (i32, i32) {
    %c0_i32 = arith.constant 0 : i32
    %c0_i32_0 = arith.constant 0 : i32
    return %arg0, %c0_i32 : i32, i32
  }
}

</mosaic_0001>

<llo_original>
// kernel: tpu_custom_call.1
$region0: #{tpu_custom_call.1}
  #allocation0 [shape = 'u32[]', space=smem, size = 0x4, offset = 0x4, fixed_abs, tag = 'smem constant byte address 0x4 - core index']
  #allocation1 [shape = 'u32[144,128]{1,0:T(1,128)}', space=vmem, size = 0x12000, scoped, tag = 'internal scratch']
  %s0 = inlined_call_operand.hbm [shape: f32[8,8], index: 0, kind: input, shape index: {}]
  %s1 = inlined_call_operand.hbm [shape: f32[136,128], index: 1, kind: input, shape index: {}]
  %s2 = inlined_call_operand.hbm [shape: f32[8,128], index: 2, kind: output, shape index: {}]
  %s3 = sld [smem:[#allocation0]]
  $region26: #{tpu_custom_call.1} parent=0
    _
  %s5 = ssub.s32 1, %s3
  %s6 = scalar_select 0, %s5, %s3
  $region1: #{tpu_custom_call.1} parent=0
    #allocation2 [shape = 'u8[4096]{0}', space=vmem, size = 0x1000, scoped, tag = 'input window, operand 0, single buffered']
    #allocation3 [shape = 's32[1]{0}', space=sflag, size = 0x4, scoped, tag = 'scoped memory for tpu_custom_call.1']
    #allocation4 [shape = 's32[1]{0}', space=sflag, size = 0x4, scoped, tag = 'scoped memory for tpu_custom_call.1']
    #allocation5 [shape = 'u8[69632]{0}', space=vmem, size = 0x11000, scoped, tag = 'input window, operand 1, single buffered']
    #allocation6 [shape = 's32[1]{0}', space=sflag, size = 0x4, scoped, tag = 'scoped memory for tpu_custom_call.1']
    #allocation7 [shape = 'u8[4096]{0}', space=vmem, size = 0x1000, scoped, tag = 'output window, operand 0, single buffered']
    %7 = vsyncpa [#allocation3], 0
    %8 = vsyncpa [#allocation6], 0
    %9 = vsyncpa [#allocation4], 0
    // Predicated region
    $region2: #{tpu_custom_call.1} parent=1 // pred_check
      _
    $region3: #{tpu_custom_call.1} parent=1 // pred_check_branch
      %11 = sbr.rel (0) target = $region5
    $region4: #{tpu_custom_call.1} parent=1 // pred_region
      %s13 = ssub.s32 128, 128
      %14 = vsyncadd [#allocation3], %s13
      %s16 = sshll.u32 [#allocation2], 4
      %s17 = int_to_ptr.vmem [resolvable:$true] %s16
      %19 = dma.hbm_to_vmem [thread:$0]  %s0, 128, %s17, [#allocation3]
    $region5: #{tpu_custom_call.1} parent=1 // pred_fallthru
      _
    // Predicated region
    $region6: #{tpu_custom_call.1} parent=1 // pred_check
      _
    $region7: #{tpu_custom_call.1} parent=1 // pred_check_branch
      %21 = sbr.rel (0) target = $region9
    $region8: #{tpu_custom_call.1} parent=1 // pred_region
      %s23 = ssub.s32 2176, 2176
      %24 = vsyncadd [#allocation6], %s23
      %s25 = sshll.u32 [#allocation5], 4
      %s26 = int_to_ptr.vmem [resolvable:$true] %s25
      %31 = dma.hbm_to_vmem [thread:$0]  %s1, 2176, %s26, [#allocation6], 128, 128, 8
    $region9: #{tpu_custom_call.1} parent=1 // pred_fallthru
      _
    // Predicated region
    $region10: #{tpu_custom_call.1} parent=1 // pred_check
      _
    $region11: #{tpu_custom_call.1} parent=1 // pred_check_branch
      %33 = sbr.rel (0) target = $region13
    $region12: #{tpu_custom_call.1} parent=1 // pred_region
      %34 = dma.done [#allocation3], 128
    $region13: #{tpu_custom_call.1} parent=1 // pred_fallthru
      _
    // Predicated region
    $region14: #{tpu_custom_call.1} parent=1 // pred_check
      _
    $region15: #{tpu_custom_call.1} parent=1 // pred_check_branch
      %36 = sbr.rel (0) target = $region17
    $region16: #{tpu_custom_call.1} parent=1 // pred_region
      %37 = dma.done [#allocation6], 2176
    $region17: #{tpu_custom_call.1} parent=1 // pred_fallthru
      _
    %v38 = vld [vmem:[#allocation5] sm:$0xff]
    %v39 = vld [vmem:[#allocation5 + $0x8] sm:$0xff]
    %v40 = vld [vmem:[#allocation5 + $0x10] sm:$0xff]
    %v41 = vld [vmem:[#allocation5 + $0x18] sm:$0xff]
    %v42 = vld [vmem:[#allocation5 + $0x20] sm:$0xff]
    %v43 = vld [vmem:[#allocation5 + $0x28] sm:$0xff]
    %v44 = vld [vmem:[#allocation5 + $0x30] sm:$0xff]
    %v45 = vld [vmem:[#allocation5 + $0x38] sm:$0xff]
    %v46 = vld [vmem:[#allocation5 + $0x40] sm:$0xff]
    %v47 = vld [vmem:[#allocation5 + $0x48] sm:$0xff]
    %v48 = vld [vmem:[#allocation5 + $0x50] sm:$0xff]
    %v49 = vld [vmem:[#allocation5 + $0x58] sm:$0xff]
    %v50 = vld [vmem:[#allocation5 + $0x60] sm:$0xff]
    %v51 = vld [vmem:[#allocation5 + $0x68] sm:$0xff]
    %v52 = vld [vmem:[#allocation5 + $0x70] sm:$0xff]
    %v53 = vld [vmem:[#allocation5 + $0x78] sm:$0xff]
    %v54 = vld [vmem:[#allocation5 + $0x80] sm:$0xff]
    %v55 = vld [vmem:[#allocation2] sm:$0xff]
    %vm56 = vcmask 64512
    %v58 = vsel %vm56, %v55, 0
    %60 = vmatprep.subr.mxu0 0.0
    %61 = vmatpush1.msra.mxu0 %v38
    %62 = vmatprep.subr.mxu0 0.0
    %63 = vmatpush1.msra.mxu0 0.0
    %64 = vmatprep.subr.mxu0 0.0
    %65 = vmatpush1.msra.mxu0 0.0
    %66 = vmatprep.subr.mxu0 0.0
    %67 = vmatpush1.msra.mxu0 0.0
    %68 = vmatprep.subr.mxu0 0.0
    %69 = vmatpush1.msra.mxu0 0.0
    %70 = vmatprep.subr.mxu0 0.0
    %71 = vmatpush1.msra.mxu0 0.0
    %72 = vmatprep.subr.mxu0 0.0
    %73 = vmatpush1.msra.mxu0 0.0
    %74 = vmatprep.subr.mxu0 0.0
    %75 = vmatpush1.msra.mxu0 0.0
    %76 = vmatprep.subr.mxu0 0.0
    %77 = vmatpush1.msra.mxu0 0.0
    %78 = vmatprep.subr.mxu0 0.0
    %79 = vmatpush1.msra.mxu0 0.0
    %80 = vmatprep.subr.mxu0 0.0
    %81 = vmatpush1.msra.mxu0 0.0
    %82 = vmatprep.subr.mxu0 0.0
    %83 = vmatpush1.msra.mxu0 0.0
    %84 = vmatprep.subr.mxu0 0.0
    %85 = vmatpush1.msra.mxu0 0.0
    %86 = vmatprep.subr.mxu0 0.0
    %87 = vmatpush1.msra.mxu0 0.0
    %88 = vmatprep.subr.mxu0 0.0
    %89 = vmatpush1.msra.mxu0 0.0
    %90 = vmatprep.subr.mxu0 0.0
    %91 = vmatpush1.msra.mxu0 0.0
    %92 = vmatprep.subr.mxu0 0.0
    %93 = vmatpush1.msra.mxu0 0.0
    %94 = vmatprep.subr.mxu0 0.0
    %95 = vmatpush1.msra.mxu0 0.0
    %96 = vmatprep.subr.mxu0 0.0
    %97 = vmatpush1.msra.mxu0 0.0
    %98 = vmatprep.subr.mxu0 0.0
    %99 = vmatpush1.msra.mxu0 0.0
    %100 = vmatprep.subr.mxu0 0.0
    %101 = vmatpush1.msra.mxu0 0.0
    %102 = vmatprep.subr.mxu0 0.0
    %103 = vmatpush1.msra.mxu0 0.0
    %104 = vmatprep.subr.mxu0 0.0
    %105 = vmatpush1.msra.mxu0 0.0
    %106 = vmatprep.subr.mxu0 0.0
    %107 = vmatpush1.msra.mxu0 0.0
    %108 = vmatprep.subr.mxu0 0.0
    %109 = vmatpush1.msra.mxu0 0.0
    %110 = vmatprep.subr.mxu0 0.0
    %111 = vmatpush1.msra.mxu0 0.0
    %112 = vmatprep.subr.mxu0 0.0
    %113 = vmatpush1.msra.mxu0 0.0
    %114 = vmatprep.subr.mxu0 0.0
    %115 = vmatpush1.msra.mxu0 0.0
    %116 = vmatprep.subr.mxu0 0.0
    %117 = vmatpush1.msra.mxu0 0.0
    %118 = vmatprep.subr.mxu0 0.0
    %119 = vmatpush1.msra.mxu0 0.0
    %120 = vmatprep.subr.mxu0 0.0
    %121 = vmatpush1.msra.mxu0 0.0
    %122 = vmatprep.subr.mxu0 0.0
    %123 = vmatpush1.msra.mxu0 0.0
    %124 = vmatprep.mubr.f32.mxu0 0.0
    %125 = vmatmul.mubr.f32.gmra.mrb[0].mxu0 %v58
    %v126 = vpop.f32.mrb[0].mxu0
    %v127 = vadd.f32 0.0, %v126
    %v128 = vpop.f32.mrb[0].mxu0
    %129 = vdwg.mxu0
    %v130 = vmax.f32 %v127, 0.0
    %131 = vmatprep.subr.mxu0 0.0
    %132 = vmatpush1.msra.mxu0 %v39
    %133 = vmatprep.subr.mxu0 0.0
    %134 = vmatpush1.msra.mxu0 %v40
    %135 = vmatprep.subr.mxu0 0.0
    %136 = vmatpush1.msra.mxu0 %v41
    %137 = vmatprep.subr.mxu0 0.0
    %138 = vmatpush1.msra.mxu0 %v42
    %139 = vmatprep.subr.mxu0 0.0
    %140 = vmatpush1.msra.mxu0 %v43
    %141 = vmatprep.subr.mxu0 0.0
    %142 = vmatpush1.msra.mxu0 %v44
    %143 = vmatprep.subr.mxu0 0.0
    %144 = vmatpush1.msra.mxu0 %v45
    %145 = vmatprep.subr.mxu0 0.0
    %146 = vmatpush1.msra.mxu0 %v46
    %147 = vmatprep.subr.mxu0 0.0
    %148 = vmatpush1.msra.mxu0 %v47
    %149 = vmatprep.subr.mxu0 0.0
    %150 = vmatpush1.msra.mxu0 %v48
    %151 = vmatprep.subr.mxu0 0.0
    %152 = vmatpush1.msra.mxu0 %v49
    %153 = vmatprep.subr.mxu0 0.0
    %154 = vmatpush1.msra.mxu0 %v50
    %155 = vmatprep.subr.mxu0 0.0
    %156 = vmatpush1.msra.mxu0 %v51
    %157 = vmatprep.subr.mxu0 0.0
    %158 = vmatpush1.msra.mxu0 %v52
    %159 = vmatprep.subr.mxu0 0.0
    %160 = vmatpush1.msra.mxu0 %v53
    %161 = vmatprep.subr.mxu0 0.0
    %162 = vmatpush1.msra.mxu0 %v54
    %163 = vmatprep.subr.mxu0 0.0
    %164 = vmatpush1.msra.mxu0 0.0
    %165 = vmatprep.subr.mxu0 0.0
    %166 = vmatpush1.msra.mxu0 0.0
    %167 = vmatprep.subr.mxu0 0.0
    %168 = vmatpush1.msra.mxu0 0.0
    %169 = vmatprep.subr.mxu0 0.0
    %170 = vmatpush1.msra.mxu0 0.0
    %171 = vmatprep.subr.mxu0 0.0
    %172 = vmatpush1.msra.mxu0 0.0
    %173 = vmatprep.subr.mxu0 0.0
    %174 = vmatpush1.msra.mxu0 0.0
    %175 = vmatprep.subr.mxu0 0.0
    %176 = vmatpush1.msra.mxu0 0.0
    %177 = vmatprep.subr.mxu0 0.0
    %178 = vmatpush1.msra.mxu0 0.0
    %179 = vmatprep.subr.mxu0 0.0
    %180 = vmatpush1.msra.mxu0 0.0
    %181 = vmatprep.subr.mxu0 0.0
    %182 = vmatpush1.msra.mxu0 0.0
    %183 = vmatprep.subr.mxu0 0.0
    %184 = vmatpush1.msra.mxu0 0.0
    %185 = vmatprep.subr.mxu0 0.0
    %186 = vmatpush1.msra.mxu0 0.0
    %187 = vmatprep.subr.mxu0 0.0
    %188 = vmatpush1.msra.mxu0 0.0
    %189 = vmatprep.subr.mxu0 0.0
    %190 = vmatpush1.msra.mxu0 0.0
    %191 = vmatprep.subr.mxu0 0.0
    %192 = vmatpush1.msra.mxu0 0.0
    %193 = vmatprep.subr.mxu0 0.0
    %194 = vmatpush1.msra.mxu0 0.0
    %195 = vmatprep.mubr.f32.mxu0 0.0
    %196 = vmatmul.mubr.f32.gmra.mrb[0].mxu0 %v130
    %v197 = vpop.f32.mrb[0].mxu0
    %v198 = vadd.f32 0.0, %v197
    %v199 = vpop.f32.mrb[0].mxu0
    %200 = vdwg.mxu0
    %201 = vst [vmem:[#allocation7] sm:$0xff] %v198
    // Predicated region
    $region18: #{tpu_custom_call.1} parent=1 // pred_check
      _
    $region19: #{tpu_custom_call.1} parent=1 // pred_check_branch
      %203 = sbr.rel (0) target = $region21
    $region20: #{tpu_custom_call.1} parent=1 // pred_region
      %s205 = ssub.s32 128, 128
      %206 = vsyncadd [#allocation4], %s205
      %s208 = sshll.u32 [#allocation7], 4
      %s209 = int_to_ptr.vmem [resolvable:$true] %s208
      %211 = dma.vmem_to_hbm [thread:$0]  %s209, 128, %s2, [#allocation4]
    $region21: #{tpu_custom_call.1} parent=1 // pred_fallthru
      _
    // Predicated region
    $region22: #{tpu_custom_call.1} parent=1 // pred_check
      _
    $region23: #{tpu_custom_call.1} parent=1 // pred_check_branch
      %213 = sbr.rel (0) target = $region25
    $region24: #{tpu_custom_call.1} parent=1 // pred_region
      %214 = dma.done [#allocation4], 128
    $region25: #{tpu_custom_call.1} parent=1 // pred_fallthru
      _
    %215 = vsyncpa [#allocation3], 1
    %216 = vsyncpa [#allocation6], 1
    %217 = vsyncpa [#allocation4], 1

</llo_original>
